<compile_context>
chip_gen: v6e
topology: v6e:2x2x1
jax: 0.10.0
libtpu: 0.0.40
codegen_flags: <defaults>
</compile_context>

<pallas_src>
import functools
import math

import jax
import jax.numpy as jnp
from jax.experimental import pallas as pl
from jax.experimental.pallas import tpu as pltpu


def _round_up(n: int, m: int) -> int:
    return ((n + m - 1) // m) * m


def _cdiv(a: int, b: int) -> int:
    return -(-a // b)


def _vmem_caps():
    """(tile-sizing budget, vmem_limit_bytes), scaled to this chip's VMEM."""
    cap = 64 << 20                       # conservative default (v7x: 64 MiB / TC)
    try:
        cap = int(getattr(pltpu.get_tpu_info(), "vmem_capacity_bytes", cap))
    except Exception:
        pass
    return int(cap * 0.65), int(cap * 0.85)


# ---------------------------------------------------------------------------
# Kernels
# ---------------------------------------------------------------------------

def _match_dtypes(a, b):
    """Promote operands to a common dtype for the MXU dot (in-kernel, cheap)."""
    if a.dtype != b.dtype:
        ct = jnp.promote_types(a.dtype, b.dtype)
        a, b = a.astype(ct), b.astype(ct)
    return a, b


def _resident_kernel(num_members, x_shared, has_bias, activation, *refs):
    # x_ref: (TB, D) if x_shared else (E, TB, D); w_ref: (E, D, H)
    # b_ref: (E, 1, H) [optional]; o_ref: (E, TB, H)
    if has_bias:
        x_ref, w_ref, b_ref, o_ref = refs
    else:
        (x_ref, w_ref, o_ref), b_ref = refs, None
    x_all = x_ref[...] if x_shared else None
    for e in range(num_members):                       # static unroll (small E)
        xe = x_all if x_shared else x_ref[e]
        xe, we = _match_dtypes(xe, w_ref[e])
        acc = jnp.dot(xe, we, preferred_element_type=jnp.float32)
        if has_bias:
            acc = acc + b_ref[e].astype(jnp.float32)
        if activation is not None:
            acc = activation(acc)
        o_ref[e] = acc.astype(o_ref.dtype)


def _member_kernel(has_bias, activation, *refs):
    # x_ref: (TB, D); w_ref: (D, H); b_ref: (1, H) [optional]; o_ref: (TB, H)
    if has_bias:
        x_ref, w_ref, b_ref, o_ref = refs
    else:
        (x_ref, w_ref, o_ref), b_ref = refs, None
    xe, we = _match_dtypes(x_ref[...], w_ref[...])
    acc = jnp.dot(xe, we, preferred_element_type=jnp.float32)
    if has_bias:
        acc = acc + b_ref[...].astype(jnp.float32)
    if activation is not None:
        acc = activation(acc)
    o_ref[...] = acc.astype(o_ref.dtype)


def _ktiled_kernel(has_bias, activation, *refs):
    # x_ref: (TB, TK); w_ref: (TK, H); b_ref: (1, H) [opt]
    # o_ref: (TB, H);  acc_ref: (TB, H) f32 scratch
    acc_ref = refs[-1]
    o_ref = refs[-2]
    x_ref, w_ref = refs[0], refs[1]
    b_ref = refs[2] if has_bias else None

    k = pl.program_id(2)

    @pl.when(k == 0)
    def _():
        acc_ref[...] = jnp.zeros_like(acc_ref)

    xe, we = _match_dtypes(x_ref[...], w_ref[...])
    acc_ref[...] += jnp.dot(xe, we, preferred_element_type=jnp.float32)

    @pl.when(k == pl.num_programs(2) - 1)
    def _():
        out = acc_ref[...]
        if has_bias:
            out = out + b_ref[...].astype(jnp.float32)
        if activation is not None:
            out = activation(out)
        o_ref[...] = out.astype(o_ref.dtype)


# ---------------------------------------------------------------------------
# Tile sizing
# ---------------------------------------------------------------------------

def _pick_tb(avail_bytes, row_bytes, b, sub, cap=4096):
    """Largest batch tile whose working set fits `avail_bytes` (0 if none fits)."""
    if avail_bytes <= 0 or row_bytes <= 0:
        return 0
    tb = min(avail_bytes // row_bytes, cap)
    if tb >= b:
        return b                        # single tile spanning the full batch
    return int(tb // sub) * sub


def _resolve_tb(tb_auto, block_b, b, sub):
    tb = tb_auto if block_b is None else int(block_b)
    tb = max(tb, sub)
    if tb >= b:
        return b
    return max(sub, (tb // sub) * sub)


# ---------------------------------------------------------------------------
# Wrapper
# ---------------------------------------------------------------------------

def ensemble_linear(x, weight, bias=None, *, x_shared=None, activation=None,
                    block_b=None, block_k=None, weights_resident=None):
    """Pallas-TPU forward of EnsembleLinearLayer.

    x:      (E, ..., D) per-member inputs, or (..., D) shared ("first layer") input.
    weight: (E, D, H);  bias: (E, 1, H) / (E, H) or None.
    activation: optional elementwise fn fused into the epilogue (e.g. jax.nn.silu).
    Returns (E, ..., H) in result_type(x, weight).
    """
    E, D, H = weight.shape
    if x_shared is None:
        x_shared = not (x.ndim >= 3 and x.shape[0] == E)

    if x_shared:
        assert x.shape[-1] == D
        batch_shape = x.shape[:-1]
        B = int(math.prod(batch_shape)) if batch_shape else 1
        x_arr = x.reshape(B, D)
    else:
        assert x.shape[0] == E and x.shape[-1] == D
        batch_shape = x.shape[1:-1]
        B = int(math.prod(batch_shape)) if batch_shape else 1
        x_arr = x.reshape(E, B, D)

    has_bias = bias is not None
    if has_bias:
        bias = bias.reshape(E, 1, H)

    out_dtype = jnp.result_type(x.dtype, weight.dtype)
    x_isize = jnp.dtype(x_arr.dtype).itemsize
    w_isize = jnp.dtype(weight.dtype).itemsize
    o_isize = jnp.dtype(out_dtype).itemsize
    b_isize = jnp.dtype(bias.dtype).itemsize if has_bias else 0

    budget, vmem_limit = _vmem_caps()
    # sublane alignment for the batch dim of the x / out tiles
    sub = max(8, 8 * 4 // x_isize, 8 * 4 // o_isize)

    # Double-buffered VMEM footprints (Pallas double-buffers even b-invariant blocks).
    wb_resident = 2 * E * (D * H * w_isize + H * b_isize)
    row_resident = 2 * ((1 if x_shared else E) * D * x_isize + E * H * o_isize)
    wb_member = 2 * (D * H * w_isize + H * b_isize)
    row_member = 2 * (D * x_isize + H * o_isize)

    # ---- schedule selection --------------------------------------------------
    if block_k is not None and block_k < D:
        path = "ktiled"
    elif (weights_resident is not False and
          _pick_tb(budget - wb_resident, row_resident, B, sub) >= min(B, 256)):
        path = "resident"
    elif (weights_resident is not True and
          _pick_tb(budget - wb_member, row_member, B, sub) >= min(B, sub)):
        path = "member"
    elif weights_resident is True:
        path = "resident"               # honor explicit request
    else:
        path = "ktiled"

    TK, n_k, Dp = D, 1, D
    if path == "resident":
        tb_auto = _pick_tb(budget - wb_resident, row_resident, B, sub)
        TB = _resolve_tb(max(tb_auto, sub), block_b, B, sub)
    elif path == "member":
        tb_auto = _pick_tb(budget - wb_member, row_member, B, sub)
        TB = _resolve_tb(max(tb_auto, sub), block_b, B, sub)
    else:  # ktiled
        if block_k is not None:
            TK = max(128, (int(block_k) // 128) * 128)
        else:
            # weight block (double-buffered) gets ~1/3 of the budget
            TK = max(128, ((budget // 3) // max(1, 2 * H * w_isize)) // 128 * 128)
        TK = min(TK, _round_up(D, 128))
        Dp = _round_up(D, TK)
        n_k = Dp // TK
        wb_k = 2 * (TK * H * w_isize + H * b_isize)
        row_k = 2 * (TK * x_isize + H * o_isize) + H * 4     # + f32 accumulator
        tb_auto = _pick_tb(budget - wb_k, row_k, B, sub)
        TB = _resolve_tb(max(tb_auto, sub), block_b, B, sub)

    # ---- batch tiling / padding (balanced to minimize padded rows) -----------
    if TB >= B:
        TB, n_b, Bp = B, 1, B
    else:
        n_b = _cdiv(B, TB)
        TB = _round_up(_cdiv(B, n_b), sub)
        Bp = TB * n_b

    if Bp != B:
        pad_b = [(0, Bp - B), (0, 0)] if x_shared else [(0, 0), (0, Bp - B), (0, 0)]
        x_arr = jnp.pad(x_arr, pad_b)

    if Dp != D:
        # TODO(synk): for very large in_size, pre-pad weight once at parameter-load
        # time instead of per call.
        pad_d = [(0, 0), (0, Dp - D)] if x_shared else [(0, 0), (0, 0), (0, Dp - D)]
        x_arr = jnp.pad(x_arr, pad_d)
        weight = jnp.pad(weight, [(0, 0), (0, Dp - D), (0, 0)])

    # ---- grid / BlockSpecs ----------------------------------------------------
    if path == "resident":
        grid = (n_b,)
        if x_shared:
            x_spec = pl.BlockSpec((TB, Dp), lambda b: (b, 0))
        else:
            x_spec = pl.BlockSpec((E, TB, Dp), lambda b: (0, b, 0))
        w_spec = pl.BlockSpec((E, Dp, H), lambda b: (0, 0, 0))
        b_spec = pl.BlockSpec((E, 1, H), lambda b: (0, 0, 0))
        o_spec = pl.BlockSpec((E, TB, H), lambda b: (0, b, 0))
        dims = ("parallel",)
        scratch = []
        kernel = functools.partial(_resident_kernel, E, x_shared, has_bias, activation)
    elif path == "member":
        # TODO(synk): on v7x with tight VMEM, add pipeline_mode=pl.Buffered(1) to the
        # inner-axis-invariant weight/bias specs to halve their VMEM footprint.
        if x_shared:
            grid = (n_b, E)        # batch outer: shared x stays VMEM-resident over e
            x_spec = pl.BlockSpec((TB, Dp), lambda b, e: (b, 0))
            w_spec = pl.BlockSpec((pl.Squeezed(), Dp, H), lambda b, e: (e, 0, 0))
            b_spec = pl.BlockSpec((pl.Squeezed(), 1, H), lambda b, e: (e, 0, 0))
            o_spec = pl.BlockSpec((pl.Squeezed(), TB, H), lambda b, e: (e, b, 0))
        else:
            grid = (E, n_b)        # member outer: (D,H) weight resident over batch
            x_spec = pl.BlockSpec((pl.Squeezed(), TB, Dp), lambda e, b: (e, b, 0))
            w_spec = pl.BlockSpec((pl.Squeezed(), Dp, H), lambda e, b: (e, 0, 0))
            b_spec = pl.BlockSpec((pl.Squeezed(), 1, H), lambda e, b: (e, 0, 0))
            o_spec = pl.BlockSpec((pl.Squeezed(), TB, H), lambda e, b: (e, b, 0))
        dims = ("parallel", "arbitrary")
        scratch = []
        kernel = functools.partial(_member_kernel, has_bias, activation)
    else:  # ktiled
        if x_shared:
            grid = (n_b, E, n_k)
            x_spec = pl.BlockSpec((TB, TK), lambda b, e, k: (b, k))
            w_spec = pl.BlockSpec((pl.Squeezed(), TK, H), lambda b, e, k: (e, k, 0))
            b_spec = pl.BlockSpec((pl.Squeezed(), 1, H), lambda b, e, k: (e, 0, 0))
            o_spec = pl.BlockSpec((pl.Squeezed(), TB, H), lambda b, e, k: (e, b, 0))
        else:
            grid = (E, n_b, n_k)
            x_spec = pl.BlockSpec((pl.Squeezed(), TB, TK), lambda e, b, k: (e, b, k))
            w_spec = pl.BlockSpec((pl.Squeezed(), TK, H), lambda e, b, k: (e, k, 0))
            b_spec = pl.BlockSpec((pl.Squeezed(), 1, H), lambda e, b, k: (e, 0, 0))
            o_spec = pl.BlockSpec((pl.Squeezed(), TB, H), lambda e, b, k: (e, b, 0))
        dims = ("parallel", "parallel", "arbitrary")
        scratch = [pltpu.VMEM((TB, H), jnp.float32)]
        kernel = functools.partial(_ktiled_kernel, has_bias, activation)

    in_arrays = [x_arr, weight] + ([bias] if has_bias else [])
    in_specs = [x_spec, w_spec] + ([b_spec] if has_bias else [])

    # Advisory cost estimate (actual, unpadded-H traffic; counts weight/x re-reads).
    flops = 2 * E * Bp * Dp * H
    x_bytes = x_arr.size * x_isize
    w_bytes = weight.size * w_isize
    if path == "member" and x_shared:
        w_bytes *= n_b
    elif path == "ktiled":
        w_bytes *= n_b
        if x_shared:
            x_bytes *= E
    bytes_accessed = (x_bytes + w_bytes + (E * H * b_isize if has_bias else 0)
                      + E * Bp * H * o_isize)
    transcendentals = E * Bp * H if activation is not None else 0

    out_p = pl.pallas_call(
        kernel,
        out_shape=jax.ShapeDtypeStruct((E, Bp, H), out_dtype),
        grid_spec=pltpu.PrefetchScalarGridSpec(
            num_scalar_prefetch=0,
            grid=grid,
            in_specs=in_specs,
            out_specs=o_spec,
            scratch_shapes=scratch),
        compiler_params=pltpu.CompilerParams(
            dimension_semantics=dims,
            vmem_limit_bytes=vmem_limit),
        cost_estimate=pl.CostEstimate(
            flops=flops, transcendentals=transcendentals,
            bytes_accessed=bytes_accessed),
    )(*in_arrays)

    out = out_p if Bp == B else out_p[:, :B]
    return out.reshape((E,) + tuple(batch_shape) + (H,))


if __name__ == "__main__":
    # Small, deterministic shapes consistent with the module's __init__
    # (num_members=4, in_size=32, out_size=32, bias=True).
    num_members, in_size, out_size = 4, 32, 32
    batch = 8
    hi = jax.lax.Precision.HIGHEST

    key = jax.random.PRNGKey(0)
    k_w, k_b, k_x, k_xs = jax.random.split(key, 4)

    weight = jax.random.uniform(k_w, (num_members, in_size, out_size), jnp.float32)
    bias = jax.random.uniform(k_b, (num_members, 1, out_size), jnp.float32)
    x = jax.random.uniform(k_x, (num_members, batch, in_size), jnp.float32)
    x_sh = jax.random.uniform(k_xs, (batch, in_size), jnp.float32)

    ref = jnp.einsum("ebd,edh->ebh", x, weight, precision=hi) + bias
    ref_sh = jnp.einsum("bd,edh->ebh", x_sh, weight, precision=hi) + bias

    # 1) default: fully VMEM-resident ensemble weights, per-member x.
    out = jax.block_until_ready(ensemble_linear(x, weight, bias))
    assert out.shape == (num_members, batch, out_size)
    assert jnp.allclose(out, ref, rtol=1e-2, atol=1e-2)

    # 2) "first layer" path: x shared across members (no HBM broadcast of x).
    out_sh = jax.block_until_ready(ensemble_linear(x_sh, weight, bias))
    assert out_sh.shape == (num_members, batch, out_size)
    assert jnp.allclose(out_sh, ref_sh, rtol=1e-2, atol=1e-2)

    # 3) per-member fallback path (weights not fully resident), fused SiLU, no bias.
    out_pm = jax.block_until_ready(
        ensemble_linear(x, weight, None, activation=jax.nn.silu,
                        weights_resident=False))
    ref_pm = jax.nn.silu(jnp.einsum("ebd,edh->ebh", x, weight, precision=hi))
    assert jnp.allclose(out_pm, ref_pm, rtol=1e-2, atol=1e-2)

    # 3b) per-member fallback with shared x (batch-outer grid keeps x resident).
    out_pms = jax.block_until_ready(
        ensemble_linear(x_sh, weight, bias, weights_resident=False))
    assert jnp.allclose(out_pms, ref_sh, rtol=1e-2, atol=1e-2)

    # 4) K-tiled reduction path (larger in_size, forced block_k) — per-member x.
    D2 = 256
    w2 = jax.random.uniform(jax.random.PRNGKey(1), (num_members, D2, out_size),
                            jnp.float32)
    x2 = jax.random.uniform(jax.random.PRNGKey(2), (num_members, batch, D2),
                            jnp.float32)
    ref2 = jnp.einsum("ebd,edh->ebh", x2, w2, precision=hi) + bias
    out2 = jax.block_until_ready(ensemble_linear(x2, w2, bias, block_k=128))
    assert jnp.allclose(out2, ref2, rtol=1e-2, atol=1e-2)

    # 4b) K-tiled path with shared x.
    x2s = jax.random.uniform(jax.random.PRNGKey(3), (batch, D2), jnp.float32)
    ref2s = jnp.einsum("bd,edh->ebh", x2s, w2, precision=hi) + bias
    out2s = jax.block_until_ready(ensemble_linear(x2s, w2, bias, block_k=128))
    assert jnp.allclose(out2s, ref2s, rtol=1e-2, atol=1e-2)

    print("KERNEL_OK")
</pallas_src>

<mosaic_0001>
module attributes {stable_mosaic.version = 11 : i64} {
  func.func @_resident_kernel(%arg0: i32, %arg1: memref<4x8x32xf32, #tpu.memory_space<vmem>>, %arg2: memref<4x32x32xf32, #tpu.memory_space<vmem>>, %arg3: memref<4x1x32xf32, #tpu.memory_space<vmem>>, %arg4: memref<4x8x32xf32, #tpu.memory_space<vmem>>) attributes {dimension_semantics = [#tpu.dimension_semantics<parallel>], iteration_bounds = array<i64: 1>, scalar_prefetch = 0 : i64, scratch_operands = 0 : i64, tpu.core_type = #tpu.core_type<tc>, window_params = [{transform_indices = @transform_0, window_bounds = array<i64: 4, 8, 32>}, {pipeline_mode = #tpu.pipeline_mode<synchronous>, transform_indices = @transform_1, window_bounds = array<i64: 4, 32, 32>}, {pipeline_mode = #tpu.pipeline_mode<synchronous>, transform_indices = @transform_2, window_bounds = array<i64: 4, 1, 32>}, {transform_indices = @transform_3, window_bounds = array<i64: 4, 8, 32>}]} {
    %c0 = arith.constant 0 : index
    %c0_0 = arith.constant 0 : index
    %c0_1 = arith.constant 0 : index
    %0 = vector.load %arg1[%c0, %c0_0, %c0_1] : memref<4x8x32xf32, #tpu.memory_space<vmem>>, vector<1x8x32xf32>
    %1 = vector.shape_cast %0 : vector<1x8x32xf32> to vector<8x32xf32>
    %c0_2 = arith.constant 0 : index
    %c0_3 = arith.constant 0 : index
    %c0_4 = arith.constant 0 : index
    %2 = vector.load %arg2[%c0_2, %c0_3, %c0_4] : memref<4x32x32xf32, #tpu.memory_space<vmem>>, vector<1x32x32xf32>
    %3 = vector.shape_cast %2 : vector<1x32x32xf32> to vector<32x32xf32>
    %cst = arith.constant dense<0.000000e+00> : vector<8x32xf32>
    %4 = tpu.matmul %1, %3, %cst {dimension_numbers = #tpu.dot_dimension_numbers<[1], [0], [0], [1], [0, 0, 1, 1], [], []>} : vector<8x32xf32>, vector<32x32xf32>, vector<8x32xf32> -> vector<8x32xf32>
    %c0_5 = arith.constant 0 : index
    %c0_6 = arith.constant 0 : index
    %c0_7 = arith.constant 0 : index
    %5 = vector.load %arg3[%c0_5, %c0_6, %c0_7] : memref<4x1x32xf32, #tpu.memory_space<vmem>>, vector<1x1x32xf32>
    %6 = vector.shape_cast %5 : vector<1x1x32xf32> to vector<1x32xf32>
    %7 = vector.broadcast %6 : vector<1x32xf32> to vector<8x32xf32>
    %8 = arith.addf %4, %7 : vector<8x32xf32>
    %c0_8 = arith.constant 0 : index
    %c0_9 = arith.constant 0 : index
    %c0_10 = arith.constant 0 : index
    %9 = vector.load %arg4[%c0_8, %c0_9, %c0_10] : memref<4x8x32xf32, #tpu.memory_space<vmem>>, vector<1x8x32xf32>
    %10 = vector.shape_cast %9 : vector<1x8x32xf32> to vector<8x32xf32>
    %11 = vector.shape_cast %8 : vector<8x32xf32> to vector<1x8x32xf32>
    tpu.vector_store %arg4[%c0_8, %c0_9, %c0_10], %11 {strides = array<i32>} : memref<4x8x32xf32, #tpu.memory_space<vmem>>, vector<1x8x32xf32>,
    %c1 = arith.constant 1 : index
    %c0_11 = arith.constant 0 : index
    %c0_12 = arith.constant 0 : index
    %12 = vector.load %arg1[%c1, %c0_11, %c0_12] : memref<4x8x32xf32, #tpu.memory_space<vmem>>, vector<1x8x32xf32>
    %13 = vector.shape_cast %12 : vector<1x8x32xf32> to vector<8x32xf32>
    %c1_13 = arith.constant 1 : index
    %c0_14 = arith.constant 0 : index
    %c0_15 = arith.constant 0 : index
    %14 = vector.load %arg2[%c1_13, %c0_14, %c0_15] : memref<4x32x32xf32, #tpu.memory_space<vmem>>, vector<1x32x32xf32>
    %15 = vector.shape_cast %14 : vector<1x32x32xf32> to vector<32x32xf32>
    %cst_16 = arith.constant dense<0.000000e+00> : vector<8x32xf32>
    %16 = tpu.matmul %13, %15, %cst_16 {dimension_numbers = #tpu.dot_dimension_numbers<[1], [0], [0], [1], [0, 0, 1, 1], [], []>} : vector<8x32xf32>, vector<32x32xf32>, vector<8x32xf32> -> vector<8x32xf32>
    %c1_17 = arith.constant 1 : index
    %c0_18 = arith.constant 0 : index
    %c0_19 = arith.constant 0 : index
    %17 = vector.load %arg3[%c1_17, %c0_18, %c0_19] : memref<4x1x32xf32, #tpu.memory_space<vmem>>, vector<1x1x32xf32>
    %18 = vector.shape_cast %17 : vector<1x1x32xf32> to vector<1x32xf32>
    %19 = vector.broadcast %18 : vector<1x32xf32> to vector<8x32xf32>
    %20 = arith.addf %16, %19 : vector<8x32xf32>
    %c1_20 = arith.constant 1 : index
    %c0_21 = arith.constant 0 : index
    %c0_22 = arith.constant 0 : index
    %21 = vector.load %arg4[%c1_20, %c0_21, %c0_22] : memref<4x8x32xf32, #tpu.memory_space<vmem>>, vector<1x8x32xf32>
    %22 = vector.shape_cast %21 : vector<1x8x32xf32> to vector<8x32xf32>
    %23 = vector.shape_cast %20 : vector<8x32xf32> to vector<1x8x32xf32>
    tpu.vector_store %arg4[%c1_20, %c0_21, %c0_22], %23 {strides = array<i32>} : memref<4x8x32xf32, #tpu.memory_space<vmem>>, vector<1x8x32xf32>,
    %c2 = arith.constant 2 : index
    %c0_23 = arith.constant 0 : index
    %c0_24 = arith.constant 0 : index
    %24 = vector.load %arg1[%c2, %c0_23, %c0_24] : memref<4x8x32xf32, #tpu.memory_space<vmem>>, vector<1x8x32xf32>
    %25 = vector.shape_cast %24 : vector<1x8x32xf32> to vector<8x32xf32>
    %c2_25 = arith.constant 2 : index
    %c0_26 = arith.constant 0 : index
    %c0_27 = arith.constant 0 : index
    %26 = vector.load %arg2[%c2_25, %c0_26, %c0_27] : memref<4x32x32xf32, #tpu.memory_space<vmem>>, vector<1x32x32xf32>
    %27 = vector.shape_cast %26 : vector<1x32x32xf32> to vector<32x32xf32>
    %cst_28 = arith.constant dense<0.000000e+00> : vector<8x32xf32>
    %28 = tpu.matmul %25, %27, %cst_28 {dimension_numbers = #tpu.dot_dimension_numbers<[1], [0], [0], [1], [0, 0, 1, 1], [], []>} : vector<8x32xf32>, vector<32x32xf32>, vector<8x32xf32> -> vector<8x32xf32>
    %c2_29 = arith.constant 2 : index
    %c0_30 = arith.constant 0 : index
    %c0_31 = arith.constant 0 : index
    %29 = vector.load %arg3[%c2_29, %c0_30, %c0_31] : memref<4x1x32xf32, #tpu.memory_space<vmem>>, vector<1x1x32xf32>
    %30 = vector.shape_cast %29 : vector<1x1x32xf32> to vector<1x32xf32>
    %31 = vector.broadcast %30 : vector<1x32xf32> to vector<8x32xf32>
    %32 = arith.addf %28, %31 : vector<8x32xf32>
    %c2_32 = arith.constant 2 : index
    %c0_33 = arith.constant 0 : index
    %c0_34 = arith.constant 0 : index
    %33 = vector.load %arg4[%c2_32, %c0_33, %c0_34] : memref<4x8x32xf32, #tpu.memory_space<vmem>>, vector<1x8x32xf32>
    %34 = vector.shape_cast %33 : vector<1x8x32xf32> to vector<8x32xf32>
    %35 = vector.shape_cast %32 : vector<8x32xf32> to vector<1x8x32xf32>
    tpu.vector_store %arg4[%c2_32, %c0_33, %c0_34], %35 {strides = array<i32>} : memref<4x8x32xf32, #tpu.memory_space<vmem>>, vector<1x8x32xf32>,
    %c3 = arith.constant 3 : index
    %c0_35 = arith.constant 0 : index
    %c0_36 = arith.constant 0 : index
    %36 = vector.load %arg1[%c3, %c0_35, %c0_36] : memref<4x8x32xf32, #tpu.memory_space<vmem>>, vector<1x8x32xf32>
    %37 = vector.shape_cast %36 : vector<1x8x32xf32> to vector<8x32xf32>
    %c3_37 = arith.constant 3 : index
    %c0_38 = arith.constant 0 : index
    %c0_39 = arith.constant 0 : index
    %38 = vector.load %arg2[%c3_37, %c0_38, %c0_39] : memref<4x32x32xf32, #tpu.memory_space<vmem>>, vector<1x32x32xf32>
    %39 = vector.shape_cast %38 : vector<1x32x32xf32> to vector<32x32xf32>
    %cst_40 = arith.constant dense<0.000000e+00> : vector<8x32xf32>
    %40 = tpu.matmul %37, %39, %cst_40 {dimension_numbers = #tpu.dot_dimension_numbers<[1], [0], [0], [1], [0, 0, 1, 1], [], []>} : vector<8x32xf32>, vector<32x32xf32>, vector<8x32xf32> -> vector<8x32xf32>
    %c3_41 = arith.constant 3 : index
    %c0_42 = arith.constant 0 : index
    %c0_43 = arith.constant 0 : index
    %41 = vector.load %arg3[%c3_41, %c0_42, %c0_43] : memref<4x1x32xf32, #tpu.memory_space<vmem>>, vector<1x1x32xf32>
    %42 = vector.shape_cast %41 : vector<1x1x32xf32> to vector<1x32xf32>
    %43 = vector.broadcast %42 : vector<1x32xf32> to vector<8x32xf32>
    %44 = arith.addf %40, %43 : vector<8x32xf32>
    %c3_44 = arith.constant 3 : index
    %c0_45 = arith.constant 0 : index
    %c0_46 = arith.constant 0 : index
    %45 = vector.load %arg4[%c3_44, %c0_45, %c0_46] : memref<4x8x32xf32, #tpu.memory_space<vmem>>, vector<1x8x32xf32>
    %46 = vector.shape_cast %45 : vector<1x8x32xf32> to vector<8x32xf32>
    %47 = vector.shape_cast %44 : vector<8x32xf32> to vector<1x8x32xf32>
    tpu.vector_store %arg4[%c3_44, %c0_45, %c0_46], %47 {strides = array<i32>} : memref<4x8x32xf32, #tpu.memory_space<vmem>>, vector<1x8x32xf32>,
    return
  }
  func.func @transform_0(%arg0: i32) -> (i32, i32, i32) {
    %c0_i32 = arith.constant 0 : i32
    %c0_i32_0 = arith.constant 0 : i32
    %c0_i32_1 = arith.constant 0 : i32
    return %c0_i32, %arg0, %c0_i32_0 : i32, i32, i32
  }
  func.func @transform_1(%arg0: i32) -> (i32, i32, i32) {
    %c0_i32 = arith.constant 0 : i32
    %c0_i32_0 = arith.constant 0 : i32
    %c0_i32_1 = arith.constant 0 : i32
    %c0_i32_2 = arith.constant 0 : i32
    return %c0_i32, %c0_i32_0, %c0_i32_1 : i32, i32, i32
  }
  func.func @transform_2(%arg0: i32) -> (i32, i32, i32) {
    %c0_i32 = arith.constant 0 : i32
    %c0_i32_0 = arith.constant 0 : i32
    %c0_i32_1 = arith.constant 0 : i32
    %c0_i32_2 = arith.constant 0 : i32
    return %c0_i32, %c0_i32_0, %c0_i32_1 : i32, i32, i32
  }
  func.func @transform_3(%arg0: i32) -> (i32, i32, i32) {
    %c0_i32 = arith.constant 0 : i32
    %c0_i32_0 = arith.constant 0 : i32
    %c0_i32_1 = arith.constant 0 : i32
    return %c0_i32, %arg0, %c0_i32_0 : i32, i32, i32
  }
}

</mosaic_0001>

<llo_original>
// kernel: tpu_custom_call.1
$region0: #{tpu_custom_call.1}
  #allocation0 [shape = 'u32[]', space=smem, size = 0x4, offset = 0x4, fixed_abs, tag = 'smem constant byte address 0x4 - core index']
  #allocation1 [shape = 'u32[144,128]{1,0:T(1,128)}', space=vmem, size = 0x12000, scoped, tag = 'internal scratch']
  %s0 = inlined_call_operand.hbm [shape: f32[4,8,32], index: 0, kind: input, shape index: {}]
  %s1 = inlined_call_operand.hbm [shape: f32[4,32,32], index: 1, kind: input, shape index: {}]
  %s2 = inlined_call_operand.hbm [shape: f32[4,1,32], index: 2, kind: input, shape index: {}]
  %s3 = inlined_call_operand.hbm [shape: f32[4,8,32], index: 3, kind: output, shape index: {}]
  %s4 = sld [smem:[#allocation0]]
  $region34: #{tpu_custom_call.1} parent=0
    _
  %s6 = ssub.s32 1, %s4
  %s7 = scalar_select 0, %s6, %s4
  $region1: #{tpu_custom_call.1} parent=0
    #allocation2 [shape = 'u8[16384]{0}', space=vmem, size = 0x4000, scoped, tag = 'input window, operand 0, single buffered']
    #allocation3 [shape = 's32[1]{0}', space=sflag, size = 0x4, scoped, tag = 'scoped memory for tpu_custom_call.1']
    #allocation4 [shape = 's32[1]{0}', space=sflag, size = 0x4, scoped, tag = 'scoped memory for tpu_custom_call.1']
    #allocation5 [shape = 'u8[65536]{0}', space=vmem, size = 0x10000, scoped, tag = 'input window, operand 1, single buffered']
    #allocation6 [shape = 's32[1]{0}', space=sflag, size = 0x4, scoped, tag = 'scoped memory for tpu_custom_call.1']
    #allocation7 [shape = 'u8[2048]{0}', space=vmem, size = 0x800, scoped, tag = 'input window, operand 2, single buffered']
    #allocation8 [shape = 'u8[16384]{0}', space=vmem, size = 0x4000, scoped, tag = 'output window, operand 0, single buffered']
    %8 = vsyncpa [#allocation3], 0
    %9 = vsyncpa [#allocation6], 0
    %10 = vsyncpa [#allocation4], 0
    // Predicated region
    $region2: #{tpu_custom_call.1} parent=1 // pred_check
      _
    $region3: #{tpu_custom_call.1} parent=1 // pred_check_branch
      %12 = sbr.rel (0) target = $region5
    $region4: #{tpu_custom_call.1} parent=1 // pred_region
      %s14 = ssub.s32 512, 512
      %15 = vsyncadd [#allocation3], %s14
      %s16 = sshll.u32 [#allocation2], 4
      %s17 = int_to_ptr.vmem [resolvable:$true] %s16
      %22 = dma.hbm_to_vmem [thread:$0]  %s0, 512, %s17, [#allocation3], 128, 128, 8
    $region5: #{tpu_custom_call.1} parent=1 // pred_fallthru
      _
    // Predicated region
    $region6: #{tpu_custom_call.1} parent=1 // pred_check
      _
    $region7: #{tpu_custom_call.1} parent=1 // pred_check_branch
      %24 = sbr.rel (0) target = $region9
    $region8: #{tpu_custom_call.1} parent=1 // pred_region
      %s26 = ssub.s32 2048, 2048
      %27 = vsyncadd [#allocation6], %s26
      %s28 = sshll.u32 [#allocation5], 4
      %s29 = int_to_ptr.vmem [resolvable:$true] %s28
      %34 = dma.hbm_to_vmem [thread:$0]  %s1, 2048, %s29, [#allocation6], 128, 128, 8
    $region9: #{tpu_custom_call.1} parent=1 // pred_fallthru
      _
    // Predicated region
    $region10: #{tpu_custom_call.1} parent=1 // pred_check
      _
    $region11: #{tpu_custom_call.1} parent=1 // pred_check_branch
      %36 = sbr.rel (0) target = $region13
    $region12: #{tpu_custom_call.1} parent=1 // pred_region
      %s38 = ssub.s32 64, 64
      %39 = vsyncadd [#allocation6], %s38
      %s40 = sshll.u32 [#allocation7], 4
      %s41 = int_to_ptr.vmem [resolvable:$true] %s40
      %46 = dma.hbm_to_vmem [thread:$0]  %s2, 64, %s41, [#allocation6], 16, 16, 1
    $region13: #{tpu_custom_call.1} parent=1 // pred_fallthru
      _
    // Predicated region
    $region14: #{tpu_custom_call.1} parent=1 // pred_check
      _
    $region15: #{tpu_custom_call.1} parent=1 // pred_check_branch
      %48 = sbr.rel (0) target = $region17
    $region16: #{tpu_custom_call.1} parent=1 // pred_region
      %49 = dma.done [#allocation3], 512
    $region17: #{tpu_custom_call.1} parent=1 // pred_fallthru
      _
    // Predicated region
    $region18: #{tpu_custom_call.1} parent=1 // pred_check
      _
    $region19: #{tpu_custom_call.1} parent=1 // pred_check_branch
      %51 = sbr.rel (0) target = $region21
    $region20: #{tpu_custom_call.1} parent=1 // pred_region
      %52 = dma.done [#allocation6], 2048
    $region21: #{tpu_custom_call.1} parent=1 // pred_fallthru
      _
    // Predicated region
    $region22: #{tpu_custom_call.1} parent=1 // pred_check
      _
    $region23: #{tpu_custom_call.1} parent=1 // pred_check_branch
      %54 = sbr.rel (0) target = $region25
    $region24: #{tpu_custom_call.1} parent=1 // pred_region
      %55 = dma.done [#allocation6], 64
    $region25: #{tpu_custom_call.1} parent=1 // pred_fallthru
      _
    %v56 = vld [vmem:[#allocation2] sm:$0xff]
    %v57 = vld [vmem:[#allocation5] sm:$0xff]
    %v58 = vld [vmem:[#allocation5 + $0x8] sm:$0xff]
    %v59 = vld [vmem:[#allocation5 + $0x10] sm:$0xff]
    %v60 = vld [vmem:[#allocation5 + $0x18] sm:$0xff]
    %v61 = vld [vmem:[#allocation7] sm:$0x1]
    %v63 = vlaneseq
    %v64 = vshrl.u32 %v63, 7
    %v65 = vsub.s32 0, %v64
    %v66 = vrot.slane %v61, %v65
    %vm68 = vcmask 261120
    %v70 = vsel %vm68, %v56, 0
    %72 = vmatprep.subr.mxu0 0.0
    %73 = vmatpush1.msra.mxu0 0.0
    %74 = vmatprep.subr.mxu0 0.0
    %75 = vmatpush1.msra.mxu0 0.0
    %76 = vmatprep.subr.mxu0 0.0
    %77 = vmatpush1.msra.mxu0 0.0
    %78 = vmatprep.subr.mxu0 0.0
    %79 = vmatpush1.msra.mxu0 0.0
    %80 = vmatprep.subr.mxu0 0.0
    %81 = vmatpush1.msra.mxu0 0.0
    %82 = vmatprep.subr.mxu0 0.0
    %83 = vmatpush1.msra.mxu0 0.0
    %84 = vmatprep.subr.mxu0 0.0
    %85 = vmatpush1.msra.mxu0 0.0
    %86 = vmatprep.subr.mxu0 0.0
    %87 = vmatpush1.msra.mxu0 0.0
    %88 = vmatprep.subr.mxu0 0.0
    %89 = vmatpush1.msra.mxu0 0.0
    %90 = vmatprep.subr.mxu0 0.0
    %91 = vmatpush1.msra.mxu0 0.0
    %92 = vmatprep.subr.mxu0 0.0
    %93 = vmatpush1.msra.mxu0 0.0
    %94 = vmatprep.subr.mxu0 0.0
    %95 = vmatpush1.msra.mxu0 0.0
    %96 = vmatprep.subr.mxu0 0.0
    %97 = vmatpush1.msra.mxu0 %v60
    %98 = vmatprep.subr.mxu0 0.0
    %99 = vmatpush1.msra.mxu0 %v59
    %100 = vmatprep.subr.mxu0 0.0
    %101 = vmatpush1.msra.mxu0 %v58
    %102 = vmatprep.subr.mxu0 0.0
    %103 = vmatpush1.msra.mxu0 %v57
    %104 = vmatprep.subr.mxu0 0.0
    %105 = vmatpush2.msra.mxu0 0.0
    %106 = vmatprep.subr.mxu0 0.0
    %107 = vmatpush2.msra.mxu0 0.0
    %108 = vmatprep.subr.mxu0 0.0
    %109 = vmatpush2.msra.mxu0 0.0
    %110 = vmatprep.subr.mxu0 0.0
    %111 = vmatpush2.msra.mxu0 0.0
    %112 = vmatprep.subr.mxu0 0.0
    %113 = vmatpush2.msra.mxu0 0.0
    %114 = vmatprep.subr.mxu0 0.0
    %115 = vmatpush2.msra.mxu0 0.0
    %116 = vmatprep.subr.mxu0 0.0
    %117 = vmatpush2.msra.mxu0 0.0
    %118 = vmatprep.subr.mxu0 0.0
    %119 = vmatpush2.msra.mxu0 0.0
    %120 = vmatprep.subr.mxu0 0.0
    %121 = vmatpush2.msra.mxu0 0.0
    %122 = vmatprep.subr.mxu0 0.0
    %123 = vmatpush2.msra.mxu0 0.0
    %124 = vmatprep.subr.mxu0 0.0
    %125 = vmatpush2.msra.mxu0 0.0
    %126 = vmatprep.subr.mxu0 0.0
    %127 = vmatpush2.msra.mxu0 0.0
    %128 = vmatprep.subr.mxu0 0.0
    %129 = vmatpush2.msra.mxu0 0.0
    %130 = vmatprep.subr.mxu0 0.0
    %131 = vmatpush2.msra.mxu0 0.0
    %132 = vmatprep.subr.mxu0 0.0
    %133 = vmatpush2.msra.mxu0 0.0
    %134 = vmatprep.subr.mxu0 0.0
    %135 = vmatpush2.msra.mxu0 0.0
    %136 = vmatprep.mubr.f32.mxu0 0.0
    %137 = vmatmul.mubr.f32.gmra.mxu0 %v70
    %v138 = vpop.f32.mrf.mxu0
    %v139 = vadd.f32 %v66, %v138
    %v140 = vpop.f32.mrf.mxu0
    %141 = vdwg.mxu0
    %142 = vst.msk [vmem:[#allocation8] sm:$0xff] %vm68, %v139
    %s143 = scalar_lea.vmem [#allocation2], 8
    %v144 = vld [vmem:[%s143] sm:$0xff]
    %s145 = scalar_lea.vmem [#allocation5], 32
    %v146 = vld [vmem:[%s145] sm:$0xff]
    %v147 = vld [vmem:[%s145 + $0x8] sm:$0xff]
    %v148 = vld [vmem:[%s145 + $0x10] sm:$0xff]
    %v149 = vld [vmem:[%s145 + $0x18] sm:$0xff]
    %s150 = scalar_lea.vmem [#allocation7], 1
    %v151 = vld [vmem:[%s150] sm:$0x1]
    %v153 = vlaneseq
    %v154 = vshrl.u32 %v153, 7
    %v155 = vsub.s32 0, %v154
    %v156 = vrot.slane %v151, %v155
    %v159 = vsel %vm68, %v144, 0
    %161 = vmatprep.subr.mxu0 0.0
    %162 = vmatpush1.msra.mxu0 0.0
    %163 = vmatprep.subr.mxu0 0.0
    %164 = vmatpush1.msra.mxu0 0.0
    %165 = vmatprep.subr.mxu0 0.0
    %166 = vmatpush1.msra.mxu0 0.0
    %167 = vmatprep.subr.mxu0 0.0
    %168 = vmatpush1.msra.mxu0 0.0
    %169 = vmatprep.subr.mxu0 0.0
    %170 = vmatpush1.msra.mxu0 0.0
    %171 = vmatprep.subr.mxu0 0.0
    %172 = vmatpush1.msra.mxu0 0.0
    %173 = vmatprep.subr.mxu0 0.0
    %174 = vmatpush1.msra.mxu0 0.0
    %175 = vmatprep.subr.mxu0 0.0
    %176 = vmatpush1.msra.mxu0 0.0
    %177 = vmatprep.subr.mxu0 0.0
    %178 = vmatpush1.msra.mxu0 0.0
    %179 = vmatprep.subr.mxu0 0.0
    %180 = vmatpush1.msra.mxu0 0.0
    %181 = vmatprep.subr.mxu0 0.0
    %182 = vmatpush1.msra.mxu0 0.0
    %183 = vmatprep.subr.mxu0 0.0
    %184 = vmatpush1.msra.mxu0 0.0
    %185 = vmatprep.subr.mxu0 0.0
    %186 = vmatpush1.msra.mxu0 %v149
    %187 = vmatprep.subr.mxu0 0.0
    %188 = vmatpush1.msra.mxu0 %v148
    %189 = vmatprep.subr.mxu0 0.0
    %190 = vmatpush1.msra.mxu0 %v147
    %191 = vmatprep.subr.mxu0 0.0
    %192 = vmatpush1.msra.mxu0 %v146
    %193 = vmatprep.subr.mxu0 0.0
    %194 = vmatpush2.msra.mxu0 0.0
    %195 = vmatprep.subr.mxu0 0.0
    %196 = vmatpush2.msra.mxu0 0.0
    %197 = vmatprep.subr.mxu0 0.0
    %198 = vmatpush2.msra.mxu0 0.0
    %199 = vmatprep.subr.mxu0 0.0
    %200 = vmatpush2.msra.mxu0 0.0
    %201 = vmatprep.subr.mxu0 0.0
    %202 = vmatpush2.msra.mxu0 0.0
    %203 = vmatprep.subr.mxu0 0.0
    %204 = vmatpush2.msra.mxu0 0.0
    %205 = vmatprep.subr.mxu0 0.0
    %206 = vmatpush2.msra.mxu0 0.0
    %207 = vmatprep.subr.mxu0 0.0
    %208 = vmatpush2.msra.mxu0 0.0
    %209 = vmatprep.subr.mxu0 0.0
    %210 = vmatpush2.msra.mxu0 0.0
    %211 = vmatprep.subr.mxu0 0.0
    %212 = vmatpush2.msra.mxu0 0.0
    %213 = vmatprep.subr.mxu0 0.0
    %214 = vmatpush2.msra.mxu0 0.0
    %215 = vmatprep.subr.mxu0 0.0
    %216 = vmatpush2.msra.mxu0 0.0
    %217 = vmatprep.subr.mxu0 0.0
    %218 = vmatpush2.msra.mxu0 0.0
    %219 = vmatprep.subr.mxu0 0.0
    %220 = vmatpush2.msra.mxu0 0.0
    %221 = vmatprep.subr.mxu0 0.0
    %222 = vmatpush2.msra.mxu0 0.0
    %223 = vmatprep.subr.mxu0 0.0
    %224 = vmatpush2.msra.mxu0 0.0
    %225 = vmatprep.mubr.f32.mxu0 0.0
    %226 = vmatmul.mubr.f32.gmra.mxu0 %v159
    %v227 = vpop.f32.mrf.mxu0
    %v228 = vadd.f32 %v156, %v227
    %v229 = vpop.f32.mrf.mxu0
    %230 = vdwg.mxu0
    %s231 = scalar_lea.vmem [#allocation8], 8
    %232 = vst.msk [vmem:[%s231] sm:$0xff] %vm68, %v228
    %s233 = scalar_lea.vmem [#allocation2], 16
    %v234 = vld [vmem:[%s233] sm:$0xff]
    %s235 = scalar_lea.vmem [#allocation5], 64
    %v236 = vld [vmem:[%s235] sm:$0xff]
    %v237 = vld [vmem:[%s235 + $0x8] sm:$0xff]
    %v238 = vld [vmem:[%s235 + $0x10] sm:$0xff]
    %v239 = vld [vmem:[%s235 + $0x18] sm:$0xff]
    %s240 = scalar_lea.vmem [#allocation7], 2
    %v241 = vld [vmem:[%s240] sm:$0x1]
    %v243 = vlaneseq
    %v244 = vshrl.u32 %v243, 7
    %v245 = vsub.s32 0, %v244
    %v246 = vrot.slane %v241, %v245
    %v249 = vsel %vm68, %v234, 0
    %251 = vmatprep.subr.mxu0 0.0
    %252 = vmatpush1.msra.mxu0 0.0
    %253 = vmatprep.subr.mxu0 0.0
    %254 = vmatpush1.msra.mxu0 0.0
    %255 = vmatprep.subr.mxu0 0.0
    %256 = vmatpush1.msra.mxu0 0.0
    %257 = vmatprep.subr.mxu0 0.0
    %258 = vmatpush1.msra.mxu0 0.0
    %259 = vmatprep.subr.mxu0 0.0
    %260 = vmatpush1.msra.mxu0 0.0
    %261 = vmatprep.subr.mxu0 0.0
    %262 = vmatpush1.msra.mxu0 0.0
    %263 = vmatprep.subr.mxu0 0.0
    %264 = vmatpush1.msra.mxu0 0.0
    %265 = vmatprep.subr.mxu0 0.0
    %266 = vmatpush1.msra.mxu0 0.0
    %267 = vmatprep.subr.mxu0 0.0
    %268 = vmatpush1.msra.mxu0 0.0
    %269 = vmatprep.subr.mxu0 0.0
    %270 = vmatpush1.msra.mxu0 0.0
    %271 = vmatprep.subr.mxu0 0.0
    %272 = vmatpush1.msra.mxu0 0.0
    %273 = vmatprep.subr.mxu0 0.0
    %274 = vmatpush1.msra.mxu0 0.0
    %275 = vmatprep.subr.mxu0 0.0
    %276 = vmatpush1.msra.mxu0 %v239
    %277 = vmatprep.subr.mxu0 0.0
    %278 = vmatpush1.msra.mxu0 %v238
    %279 = vmatprep.subr.mxu0 0.0
    %280 = vmatpush1.msra.mxu0 %v237
    %281 = vmatprep.subr.mxu0 0.0
    %282 = vmatpush1.msra.mxu0 %v236
    %283 = vmatprep.subr.mxu0 0.0
    %284 = vmatpush2.msra.mxu0 0.0
    %285 = vmatprep.subr.mxu0 0.0
    %286 = vmatpush2.msra.mxu0 0.0
    %287 = vmatprep.subr.mxu0 0.0
    %288 = vmatpush2.msra.mxu0 0.0
    %289 = vmatprep.subr.mxu0 0.0
    %290 = vmatpush2.msra.mxu0 0.0
    %291 = vmatprep.subr.mxu0 0.0
    %292 = vmatpush2.msra.mxu0 0.0
    %293 = vmatprep.subr.mxu0 0.0
    %294 = vmatpush2.msra.mxu0 0.0
    %295 = vmatprep.subr.mxu0 0.0
    %296 = vmatpush2.msra.mxu0 0.0
    %297 = vmatprep.subr.mxu0 0.0
    %298 = vmatpush2.msra.mxu0 0.0
    %299 = vmatprep.subr.mxu0 0.0
    %300 = vmatpush2.msra.mxu0 0.0
    %301 = vmatprep.subr.mxu0 0.0
    %302 = vmatpush2.msra.mxu0 0.0
    %303 = vmatprep.subr.mxu0 0.0
    %304 = vmatpush2.msra.mxu0 0.0
    %305 = vmatprep.subr.mxu0 0.0
    %306 = vmatpush2.msra.mxu0 0.0
    %307 = vmatprep.subr.mxu0 0.0
    %308 = vmatpush2.msra.mxu0 0.0
    %309 = vmatprep.subr.mxu0 0.0
    %310 = vmatpush2.msra.mxu0 0.0
    %311 = vmatprep.subr.mxu0 0.0
    %312 = vmatpush2.msra.mxu0 0.0
    %313 = vmatprep.subr.mxu0 0.0
    %314 = vmatpush2.msra.mxu0 0.0
    %315 = vmatprep.mubr.f32.mxu0 0.0
    %316 = vmatmul.mubr.f32.gmra.mxu0 %v249
    %v317 = vpop.f32.mrf.mxu0
    %v318 = vadd.f32 %v246, %v317
    %v319 = vpop.f32.mrf.mxu0
    %320 = vdwg.mxu0
    %s321 = scalar_lea.vmem [#allocation8], 16
    %322 = vst.msk [vmem:[%s321] sm:$0xff] %vm68, %v318
    %s323 = scalar_lea.vmem [#allocation2], 24
    %v324 = vld [vmem:[%s323] sm:$0xff]
    %s325 = scalar_lea.vmem [#allocation5], 96
    %v326 = vld [vmem:[%s325] sm:$0xff]
    %v327 = vld [vmem:[%s325 + $0x8] sm:$0xff]
    %v328 = vld [vmem:[%s325 + $0x10] sm:$0xff]
    %v329 = vld [vmem:[%s325 + $0x18] sm:$0xff]
    %s330 = scalar_lea.vmem [#allocation7], 3
    %v331 = vld [vmem:[%s330] sm:$0x1]
    %v333 = vlaneseq
    %v334 = vshrl.u32 %v333, 7
    %v335 = vsub.s32 0, %v334
    %v336 = vrot.slane %v331, %v335
    %v339 = vsel %vm68, %v324, 0
    %341 = vmatprep.subr.mxu0 0.0
    %342 = vmatpush1.msra.mxu0 0.0
    %343 = vmatprep.subr.mxu0 0.0
    %344 = vmatpush1.msra.mxu0 0.0
    %345 = vmatprep.subr.mxu0 0.0
    %346 = vmatpush1.msra.mxu0 0.0
    %347 = vmatprep.subr.mxu0 0.0
    %348 = vmatpush1.msra.mxu0 0.0
    %349 = vmatprep.subr.mxu0 0.0
    %350 = vmatpush1.msra.mxu0 0.0
    %351 = vmatprep.subr.mxu0 0.0
    %352 = vmatpush1.msra.mxu0 0.0
    %353 = vmatprep.subr.mxu0 0.0
    %354 = vmatpush1.msra.mxu0 0.0
    %355 = vmatprep.subr.mxu0 0.0
    %356 = vmatpush1.msra.mxu0 0.0
    %357 = vmatprep.subr.mxu0 0.0
    %358 = vmatpush1.msra.mxu0 0.0
    %359 = vmatprep.subr.mxu0 0.0
    %360 = vmatpush1.msra.mxu0 0.0
    %361 = vmatprep.subr.mxu0 0.0
    %362 = vmatpush1.msra.mxu0 0.0
    %363 = vmatprep.subr.mxu0 0.0
    %364 = vmatpush1.msra.mxu0 0.0
    %365 = vmatprep.subr.mxu0 0.0
    %366 = vmatpush1.msra.mxu0 %v329
    %367 = vmatprep.subr.mxu0 0.0
    %368 = vmatpush1.msra.mxu0 %v328
    %369 = vmatprep.subr.mxu0 0.0
    %370 = vmatpush1.msra.mxu0 %v327
    %371 = vmatprep.subr.mxu0 0.0
    %372 = vmatpush1.msra.mxu0 %v326
    %373 = vmatprep.subr.mxu0 0.0
    %374 = vmatpush2.msra.mxu0 0.0
    %375 = vmatprep.subr.mxu0 0.0
    %376 = vmatpush2.msra.mxu0 0.0
    %377 = vmatprep.subr.mxu0 0.0
    %378 = vmatpush2.msra.mxu0 0.0
    %379 = vmatprep.subr.mxu0 0.0
    %380 = vmatpush2.msra.mxu0 0.0
    %381 = vmatprep.subr.mxu0 0.0
    %382 = vmatpush2.msra.mxu0 0.0
    %383 = vmatprep.subr.mxu0 0.0
    %384 = vmatpush2.msra.mxu0 0.0
    %385 = vmatprep.subr.mxu0 0.0
    %386 = vmatpush2.msra.mxu0 0.0
    %387 = vmatprep.subr.mxu0 0.0
    %388 = vmatpush2.msra.mxu0 0.0
    %389 = vmatprep.subr.mxu0 0.0
    %390 = vmatpush2.msra.mxu0 0.0
    %391 = vmatprep.subr.mxu0 0.0
    %392 = vmatpush2.msra.mxu0 0.0
    %393 = vmatprep.subr.mxu0 0.0
    %394 = vmatpush2.msra.mxu0 0.0
    %395 = vmatprep.subr.mxu0 0.0
    %396 = vmatpush2.msra.mxu0 0.0
    %397 = vmatprep.subr.mxu0 0.0
    %398 = vmatpush2.msra.mxu0 0.0
    %399 = vmatprep.subr.mxu0 0.0
    %400 = vmatpush2.msra.mxu0 0.0
    %401 = vmatprep.subr.mxu0 0.0
    %402 = vmatpush2.msra.mxu0 0.0
    %403 = vmatprep.subr.mxu0 0.0
    %404 = vmatpush2.msra.mxu0 0.0
    %405 = vmatprep.mubr.f32.mxu0 0.0
    %406 = vmatmul.mubr.f32.gmra.mxu0 %v339
    %v407 = vpop.f32.mrf.mxu0
    %v408 = vadd.f32 %v336, %v407
    %v409 = vpop.f32.mrf.mxu0
    %410 = vdwg.mxu0
    %s411 = scalar_lea.vmem [#allocation8], 24
    %412 = vst.msk [vmem:[%s411] sm:$0xff] %vm68, %v408
    // Predicated region
    $region26: #{tpu_custom_call.1} parent=1 // pred_check
      _
    $region27: #{tpu_custom_call.1} parent=1 // pred_check_branch
      %414 = sbr.rel (0) target = $region29
    $region28: #{tpu_custom_call.1} parent=1 // pred_region
      %s416 = ssub.s32 512, 512
      %417 = vsyncadd [#allocation4], %s416
      %s418 = sshll.u32 [#allocation8], 4
      %s419 = int_to_ptr.vmem [resolvable:$true] %s418
      %424 = dma.vmem_to_hbm [thread:$0]  %s419, 512, %s3, [#allocation4], 128, 128, 8
    $region29: #{tpu_custom_call.1} parent=1 // pred_fallthru
      _
    // Predicated region
    $region30: #{tpu_custom_call.1} parent=1 // pred_check
      _
    $region31: #{tpu_custom_call.1} parent=1 // pred_check_branch
      %426 = sbr.rel (0) target = $region33
    $region32: #{tpu_custom_call.1} parent=1 // pred_region
      %427 = dma.done [#allocation4], 512
    $region33: #{tpu_custom_call.1} parent=1 // pred_fallthru
      _
    %428 = vsyncpa [#allocation3], 1
    %429 = vsyncpa [#allocation6], 1
    %430 = vsyncpa [#allocation4], 1

</llo_original>
